<compile_context>
chip_gen: v6e
topology: v6e:2x2x1
jax: 0.10.0
libtpu: 0.0.40
codegen_flags: <defaults>
</compile_context>

<pallas_src>
import functools

import jax
import jax.numpy as jnp
from jax.experimental import pallas as pl
from jax.experimental.pallas import tpu as pltpu

EPSILON = 1e-8  # matches the PyTorch module's epsilon=1e-08 (NOT nn.InstanceNorm2d's 1e-5)


def _instance_norm_kernel(x_ref, o_ref, *, epsilon, inv_plane):
    # x_ref block: (rows_blk, H*W) — each row is one (n, c) spatial plane, lane-dense.
    x = x_ref[...].astype(jnp.float32)
    # Single pass over the tile: sum and sum-of-squares together (fused reductions).
    s = jnp.sum(x, axis=-1, keepdims=True)
    sq = jnp.sum(x * x, axis=-1, keepdims=True)
    mean = s * inv_plane
    var = jnp.maximum(sq * inv_plane - mean * mean, 0.0)  # clamp for numerical safety
    inv = jax.lax.rsqrt(var + epsilon)                    # EUP rsqrt
    o_ref[...] = ((x - mean) * inv).astype(o_ref.dtype)


def _choose_rows_block(rows, plane, itemsize=4, target_bytes=2 * 1024 * 1024):
    """Pick a rows-per-step block: multiple of 8, ~target_bytes per block."""
    if rows <= 8:
        return rows  # full extent — always a legal block dim
    max_rows = max(8, target_bytes // max(1, plane * itemsize))
    blk = min(rows, max_rows)
    blk = max(8, (blk // 8) * 8)  # keep sublane dim a multiple of 8
    return blk


def instance_norm(x, epsilon=EPSILON):
    """x: (N, C, H, W) -> (N, C, H, W), matching the PyTorch InstanceNorm.forward."""
    N, C, H, W = x.shape
    rows = N * C
    plane = H * W

    # Free layout plumbing for contiguous NCHW: each row is one (n, c) plane.
    x2 = x.reshape(rows, plane)

    rows_blk = _choose_rows_block(rows, plane, itemsize=4)
    grid = (pl.cdiv(rows, rows_blk),)

    kernel = functools.partial(
        _instance_norm_kernel, epsilon=epsilon, inv_plane=1.0 / float(plane)
    )

    out2 = pl.pallas_call(
        kernel,
        out_shape=jax.ShapeDtypeStruct((rows, plane), x.dtype),
        grid_spec=pl.GridSpec(
            grid=grid,
            in_specs=[pl.BlockSpec((rows_blk, plane), lambda i: (i, 0))],
            out_specs=pl.BlockSpec((rows_blk, plane), lambda i: (i, 0)),
        ),
        compiler_params=pltpu.CompilerParams(
            dimension_semantics=("parallel",),
            # ~8 MiB live per step; 32 MiB scoped limit covers v5e's 16 MiB default
            # and matches the v6e/v7x default, leaving plenty of headroom everywhere.
            vmem_limit_bytes=32 * 1024 * 1024,
        ),
    )(x2)

    return out2.reshape(N, C, H, W)


def instance_norm_ref(x, epsilon=EPSILON):
    """Pure-JAX reference mirroring the PyTorch module (centered two-pass form)."""
    xf = x.astype(jnp.float32)
    xc = xf - jnp.mean(xf, axis=(2, 3), keepdims=True)
    inv = jax.lax.rsqrt(jnp.mean(xc * xc, axis=(2, 3), keepdims=True) + epsilon)
    return (xc * inv).astype(x.dtype)


if __name__ == "__main__":
    key = jax.random.PRNGKey(0)
    # Small NCHW activation tensor consistent with the module's forward.
    x = jax.random.normal(key, (2, 4, 16, 16), dtype=jnp.float32)

    out = instance_norm(x)
    out = jax.block_until_ready(out)

    ref = instance_norm_ref(x)
    assert out.shape == ref.shape and out.dtype == ref.dtype
    assert jnp.allclose(out, ref, atol=1e-5, rtol=1e-5), "mismatch vs reference"

    print("KERNEL_OK")
</pallas_src>

<mosaic_0001>
module attributes {stable_mosaic.version = 11 : i64} {
  func.func @_instance_norm_kernel(%arg0: i32, %arg1: memref<8x256xf32, #tpu.memory_space<vmem>>, %arg2: memref<8x256xf32, #tpu.memory_space<vmem>>) attributes {dimension_semantics = [#tpu.dimension_semantics<parallel>], iteration_bounds = array<i64: 1>, scalar_prefetch = 0 : i64, scratch_operands = 0 : i64, tpu.core_type = #tpu.core_type<tc>, window_params = [{transform_indices = @transform_0, window_bounds = array<i64: 8, 256>}, {transform_indices = @transform_1, window_bounds = array<i64: 8, 256>}]} {
    %c0 = arith.constant 0 : index
    %c0_0 = arith.constant 0 : index
    %0 = vector.load %arg1[%c0, %c0_0] : memref<8x256xf32, #tpu.memory_space<vmem>>, vector<8x256xf32>
    %cst = arith.constant dense<0.000000e+00> : vector<8xf32>
    %1 = vector.multi_reduction <add>, %0, %cst [1] : vector<8x256xf32> to vector<8xf32>
    %2 = vector.shape_cast %1 : vector<8xf32> to vector<8x1xf32>
    %3 = arith.mulf %0, %0 : vector<8x256xf32>
    %cst_1 = arith.constant dense<0.000000e+00> : vector<8xf32>
    %4 = vector.multi_reduction <add>, %3, %cst_1 [1] : vector<8x256xf32> to vector<8xf32>
    %5 = vector.shape_cast %4 : vector<8xf32> to vector<8x1xf32>
    %cst_2 = arith.constant 3.906250e-03 : f32
    %6 = vector.broadcast %cst_2 : f32 to vector<8x1xf32>
    %7 = arith.mulf %2, %6 : vector<8x1xf32>
    %cst_3 = arith.constant 3.906250e-03 : f32
    %8 = vector.broadcast %cst_3 : f32 to vector<8x1xf32>
    %9 = arith.mulf %5, %8 : vector<8x1xf32>
    %10 = arith.mulf %7, %7 : vector<8x1xf32>
    %11 = arith.subf %9, %10 : vector<8x1xf32>
    %cst_4 = arith.constant 0.000000e+00 : f32
    %12 = vector.broadcast %cst_4 : f32 to vector<8x1xf32>
    %13 = arith.maximumf %11, %12 : vector<8x1xf32>
    %cst_5 = arith.constant 9.99999993E-9 : f32
    %14 = vector.broadcast %cst_5 : f32 to vector<8x1xf32>
    %15 = arith.addf %13, %14 : vector<8x1xf32>
    %16 = math.rsqrt %15 : vector<8x1xf32>
    %17 = vector.broadcast %7 : vector<8x1xf32> to vector<8x256xf32>
    %18 = arith.subf %0, %17 : vector<8x256xf32>
    %19 = vector.broadcast %16 : vector<8x1xf32> to vector<8x256xf32>
    %20 = arith.mulf %18, %19 : vector<8x256xf32>
    %c0_6 = arith.constant 0 : index
    %c0_7 = arith.constant 0 : index
    %21 = vector.load %arg2[%c0_6, %c0_7] : memref<8x256xf32, #tpu.memory_space<vmem>>, vector<8x256xf32>
    tpu.vector_store %arg2[%c0_6, %c0_7], %20 {strides = array<i32>} : memref<8x256xf32, #tpu.memory_space<vmem>>, vector<8x256xf32>,
    return
  }
  func.func @transform_0(%arg0: i32) -> (i32, i32) {
    %c0_i32 = arith.constant 0 : i32
    %c0_i32_0 = arith.constant 0 : i32
    return %arg0, %c0_i32 : i32, i32
  }
  func.func @transform_1(%arg0: i32) -> (i32, i32) {
    %c0_i32 = arith.constant 0 : i32
    %c0_i32_0 = arith.constant 0 : i32
    return %arg0, %c0_i32 : i32, i32
  }
}

</mosaic_0001>

<llo_original>
// kernel: tpu_custom_call.1
$region0: #{tpu_custom_call.1}
  #allocation0 [shape = 'u32[]', space=smem, size = 0x4, offset = 0x4, fixed_abs, tag = 'smem constant byte address 0x4 - core index']
  #allocation1 [shape = 'u32[144,128]{1,0:T(1,128)}', space=vmem, size = 0x12000, scoped, tag = 'internal scratch']
  %s0 = inlined_call_operand.hbm [shape: f32[8,256], index: 0, kind: input, shape index: {}]
  %s1 = inlined_call_operand.hbm [shape: f32[8,256], index: 1, kind: output, shape index: {}]
  %s2 = sld [smem:[#allocation0]]
  $region18: #{tpu_custom_call.1} parent=0
    _
  %s4 = ssub.s32 1, %s2
  %s5 = scalar_select 0, %s4, %s2
  $region1: #{tpu_custom_call.1} parent=0
    #allocation2 [shape = 'u8[8192]{0}', space=vmem, size = 0x2000, scoped, tag = 'input window, operand 0, single buffered']
    #allocation3 [shape = 's32[1]{0}', space=sflag, size = 0x4, scoped, tag = 'scoped memory for tpu_custom_call.1']
    #allocation4 [shape = 's32[1]{0}', space=sflag, size = 0x4, scoped, tag = 'scoped memory for tpu_custom_call.1']
    #allocation5 [shape = 'u8[8192]{0}', space=vmem, size = 0x2000, scoped, tag = 'output window, operand 0, single buffered']
    %6 = vsyncpa [#allocation3], 0
    %7 = vsyncpa [#allocation4], 0
    // Predicated region
    $region2: #{tpu_custom_call.1} parent=1 // pred_check
      _
    $region3: #{tpu_custom_call.1} parent=1 // pred_check_branch
      %9 = sbr.rel (0) target = $region5
    $region4: #{tpu_custom_call.1} parent=1 // pred_region
      %s11 = ssub.s32 256, 256
      %12 = vsyncadd [#allocation3], %s11
      %s14 = sshll.u32 [#allocation2], 4
      %s15 = int_to_ptr.vmem [resolvable:$true] %s14
      %17 = dma.hbm_to_vmem [thread:$0]  %s0, 256, %s15, [#allocation3]
    $region5: #{tpu_custom_call.1} parent=1 // pred_fallthru
      _
    // Predicated region
    $region6: #{tpu_custom_call.1} parent=1 // pred_check
      _
    $region7: #{tpu_custom_call.1} parent=1 // pred_check_branch
      %19 = sbr.rel (0) target = $region9
    $region8: #{tpu_custom_call.1} parent=1 // pred_region
      %20 = dma.done [#allocation3], 256
    $region9: #{tpu_custom_call.1} parent=1 // pred_fallthru
      _
    %v21 = vld [vmem:[#allocation2] sm:$0xff]
    %v22 = vld [vmem:[#allocation2 + $0x8] sm:$0xff]
    %v23 = vadd.f32 %v21, %v22
    %24 = vadd.xlane.f32.xlu0 %v23
    %v25 = vpop.xlane.xlu0 %24
    %v26 = vmul.f32 %v21, %v21
    %v27 = vmul.f32 %v22, %v22
    %v28 = vadd.f32 %v26, %v27
    %29 = vadd.xlane.f32.xlu0 %v28
    %v30 = vpop.xlane.xlu0 %29
    %v31 = vmul.f32 %v25, 0.00390625
    %v32 = vmul.f32 %v30, 0.00390625
    %v33 = vmul.f32 %v31, %v31
    %v34 = vsub.f32 %v32, %v33
    %v35 = vmax.f32 %v34, 0.0
    %v36 = vadd.f32 %v35, 1e-08
    %v37 = vrsqrt.pop %v36
    %v38 = vsub.f32 %v21, %v31
    %v39 = vsub.f32 %v22, %v31
    %v40 = vmul.f32 %v38, %v37
    %v41 = vmul.f32 %v39, %v37
    %42 = vst [vmem:[#allocation5] sm:$0xff] %v40
    %43 = vst [vmem:[#allocation5 + $0x8] sm:$0xff] %v41
    // Predicated region
    $region10: #{tpu_custom_call.1} parent=1 // pred_check
      _
    $region11: #{tpu_custom_call.1} parent=1 // pred_check_branch
      %45 = sbr.rel (0) target = $region13
    $region12: #{tpu_custom_call.1} parent=1 // pred_region
      %s47 = ssub.s32 256, 256
      %48 = vsyncadd [#allocation4], %s47
      %s50 = sshll.u32 [#allocation5], 4
      %s51 = int_to_ptr.vmem [resolvable:$true] %s50
      %53 = dma.vmem_to_hbm [thread:$0]  %s51, 256, %s1, [#allocation4]
    $region13: #{tpu_custom_call.1} parent=1 // pred_fallthru
      _
    // Predicated region
    $region14: #{tpu_custom_call.1} parent=1 // pred_check
      _
    $region15: #{tpu_custom_call.1} parent=1 // pred_check_branch
      %55 = sbr.rel (0) target = $region17
    $region16: #{tpu_custom_call.1} parent=1 // pred_region
      %56 = dma.done [#allocation4], 256
    $region17: #{tpu_custom_call.1} parent=1 // pred_fallthru
      _
    %57 = vsyncpa [#allocation3], 1
    %58 = vsyncpa [#allocation4], 1

</llo_original>
